<compile_context>
chip_gen: v5e
topology: v5e:2x2
jax: 0.10.0
libtpu: 0.0.40
codegen_flags: <defaults>
</compile_context>

<pallas_src>
import math

import jax
import jax.numpy as jnp
from jax.experimental import pallas as pl
from jax.experimental.pallas import tpu as pltpu


# ----------------------------------------------------------------------------
# Pallas kernel: fully-fused post-BERT forward pass of ExMRD.
# ----------------------------------------------------------------------------
def exmrd_kernel(frames_ref, ocr_ref, cap_ref, com_ref, cau_ref, slab_ref,
                 out_ref, x_ref):
    """frames_ref: (B, T, D_vid) bf16   raw video features
       ocr/cap/com/cau_ref: (B, D_i) f32  BERT pooler features (4 streams)
       slab_ref:   (K_pad, 2) f32       rows [0,K): fused weights, row K: fused bias
       out_ref:    (B, 2) f32           logits
       x_ref:      (B, K) f32 scratch   [frames_sum | ocr | cap | com | cau]
    """
    f32 = jnp.float32
    d_vid = frames_ref.shape[2]
    k_total = x_ref.shape[1]

    # Temporal SUM of the video stream (1/T is folded into the weight slab).
    # Cast bf16 -> f32 before the reduce so accumulation is f32 on every gen.
    x_ref[:, 0:d_vid] = jnp.sum(frames_ref[...].astype(f32), axis=1)

    # Lane-concat the four text streams behind the video features via static
    # (masked) VMEM stores — replaces the pre-kernel XLA concatenate.
    off = d_vid
    for t_ref in (ocr_ref, cap_ref, com_ref, cau_ref):
        d = t_ref.shape[1]
        x_ref[:, off:off + d] = t_ref[...].astype(f32)
        off += d

    # Single MXU push: (B, K) @ (K, 2), f32 accumulation, plus the folded bias.
    w = slab_ref[0:k_total, :]
    b = slab_ref[k_total:k_total + 1, :]
    out_ref[...] = (jnp.dot(x_ref[...], w, preferred_element_type=f32)
                    + b).astype(out_ref.dtype)


# ----------------------------------------------------------------------------
# Host-side (amortized) parameter folding -> ONE constant slab
# ----------------------------------------------------------------------------
def fold_params(params, T):
    """Fold the purely-affine head into a single (K+1, 2) slab (padded to a
    multiple of 8 sublanes).  Exact in f32 up to sum reassociation.
    WARNING: T and the positional-encoding mean are baked in — refold if the
    number of frames changes."""
    hid = params["w_cls"].shape[0]
    for k in ("w_ocr", "w_cap", "w_com", "w_cau", "w_vid"):
        assert params[k].shape[1] == hid, "inconsistent hidden dims"

    w_text_cat = jnp.concatenate(
        [params["w_ocr"], params["w_cap"], params["w_com"], params["w_cau"]],
        axis=0)                                                        # (4*Dt, hid)
    b_text_sum = (params["b_ocr"] + params["b_cap"]
                  + params["b_com"] + params["b_cau"])                 # (1, hid)

    # mean(frames + pe, axis=1) == mean(frames, axis=1) + mean(pe[:T], axis=0)
    pe_mean = jnp.mean(params["pe"][:T, :], axis=0, keepdims=True)     # (1, D_vid)
    b_vid_eff = params["b_vid"] + pe_mean @ params["w_vid"]            # (1, hid)

    # 0.5 = final mean over (frames, text); 1/T = temporal mean (kernel sums);
    # 0.125 = 0.5 * (mean over the 4 text streams).
    w_vid_fused = (0.5 / T) * (params["w_vid"] @ params["w_cls"])      # (D_vid, 2)
    w_text_fused = 0.125 * (w_text_cat @ params["w_cls"])              # (4*Dt, 2)
    b_fused = ((0.5 * b_vid_eff + 0.125 * b_text_sum) @ params["w_cls"]
               + params["b_cls"])                                      # (1, 2)

    slab = jnp.concatenate([w_vid_fused, w_text_fused, b_fused], axis=0)
    k_total = slab.shape[0] - 1                                        # D_vid + 4*Dt
    pad = (-slab.shape[0]) % 8
    if pad:
        slab = jnp.concatenate(
            [slab, jnp.zeros((pad, slab.shape[1]), slab.dtype)], axis=0)
    return {"slab": slab, "k_total": k_total, "T": T}


# ----------------------------------------------------------------------------
# Wrapper
# ----------------------------------------------------------------------------
def exmrd_forward(folded, fea_ocr, fea_caption, fea_comsense, fea_causal,
                  fea_frames):
    B, T, d_vid = fea_frames.shape
    assert T == folded["T"], "frame count changed: re-run fold_params"
    k_total = folded["k_total"]
    assert k_total == (d_vid + fea_ocr.shape[1] + fea_caption.shape[1]
                       + fea_comsense.shape[1] + fea_causal.shape[1])

    # frames is the only non-trivial DMA -> ship it bf16 (halves HBM bytes);
    # all accumulation stays in f32 inside the kernel.
    frames_bf16 = fea_frames.astype(jnp.bfloat16)

    vmem = pl.BlockSpec(memory_space=pltpu.MemorySpace.VMEM)
    return pl.pallas_call(
        exmrd_kernel,
        out_shape=jax.ShapeDtypeStruct((B, 2), jnp.float32),
        in_specs=[vmem] * 6,
        out_specs=vmem,
        scratch_shapes=[pltpu.VMEM((B, k_total), jnp.float32)],
    )(frames_bf16, fea_ocr, fea_caption, fea_comsense, fea_causal,
      folded["slab"])


# ----------------------------------------------------------------------------
# Deterministic parameter construction (matches the module's __init__ shapes)
# ----------------------------------------------------------------------------
def sinusoidal_pe(max_len, d_model):
    position = jnp.arange(max_len, dtype=jnp.float32)[:, None]
    div_term = jnp.exp(jnp.arange(0, d_model, 2, dtype=jnp.float32)
                       * -(math.log(10000.0) / d_model))
    pe = jnp.zeros((max_len, d_model), dtype=jnp.float32)
    pe = pe.at[:, 0::2].set(jnp.sin(position * div_term))
    pe = pe.at[:, 1::2].set(jnp.cos(position * div_term))
    return pe


def init_linear(key, d_in, d_out):
    # PyTorch nn.Linear default init: U(-1/sqrt(fan_in), 1/sqrt(fan_in)).
    kw, kb = jax.random.split(key)
    bound = 1.0 / math.sqrt(d_in)
    w = jax.random.uniform(kw, (d_in, d_out), jnp.float32, -bound, bound)
    b = jax.random.uniform(kb, (1, d_out), jnp.float32, -bound, bound)
    return w, b


def make_params(key, d_text, d_vid, hid_dim, pe_max_len=16, pe_dim=1024):
    keys = jax.random.split(key, 6)
    params = {}
    params["w_ocr"], params["b_ocr"] = init_linear(keys[0], d_text, hid_dim)
    params["w_cap"], params["b_cap"] = init_linear(keys[1], d_text, hid_dim)
    params["w_com"], params["b_com"] = init_linear(keys[2], d_text, hid_dim)
    params["w_cau"], params["b_cau"] = init_linear(keys[3], d_text, hid_dim)
    params["w_vid"], params["b_vid"] = init_linear(keys[4], d_vid, hid_dim)
    params["w_cls"], params["b_cls"] = init_linear(keys[5], hid_dim, 2)
    params["pe"] = sinusoidal_pe(pe_max_len, pe_dim)
    return params


# Pure-JAX reference (mirrors the PyTorch forward exactly: per-frame linear,
# unfused weights, explicit means).
def exmrd_reference(params, ocr, cap, com, cau, frames):
    T = frames.shape[1]
    f_ocr = ocr @ params["w_ocr"] + params["b_ocr"]
    f_cap = cap @ params["w_cap"] + params["b_cap"]
    f_com = com @ params["w_com"] + params["b_com"]
    f_cau = cau @ params["w_cau"] + params["b_cau"]
    fea_x = jnp.mean(jnp.stack([f_ocr, f_cap, f_com, f_cau], axis=1), axis=1)
    fr = frames + params["pe"][:T, :][None]
    fr = jnp.einsum("btd,dh->bth", fr, params["w_vid"]) + params["b_vid"][None]
    fea_frames = jnp.mean(fr, axis=1)
    fea = jnp.mean(jnp.stack([fea_frames, fea_x], axis=1), axis=1)
    return fea @ params["w_cls"] + params["b_cls"]


if __name__ == "__main__":
    # TODO(synk): the BERT_FT text encoder itself is not re-implemented; its
    # pooler_output features are synthesized as inputs.
    B, T = 2, 8            # batch, video frames (<= max_len 16)
    D_TEXT = 64            # synthetic BERT pooler dim (LazyLinear infers it)
    D_VID = 1024           # temporal_pe is hard-coded to d_model=1024
    HID = 32

    key = jax.random.PRNGKey(0)
    k_p, k_ocr, k_cap, k_com, k_cau, k_frames = jax.random.split(key, 6)

    params = make_params(k_p, D_TEXT, D_VID, HID)
    folded = fold_params(params, T)
    jax.block_until_ready(folded["slab"])

    fea_ocr = jax.random.normal(k_ocr, (B, D_TEXT), jnp.float32)
    fea_caption = jax.random.normal(k_cap, (B, D_TEXT), jnp.float32)
    fea_comsense = jax.random.normal(k_com, (B, D_TEXT), jnp.float32)
    fea_causal = jax.random.normal(k_cau, (B, D_TEXT), jnp.float32)
    # The kernel ingests bf16 frames; quantize once so kernel and reference see
    # identical frame values (all arithmetic remains f32 on both paths).
    fea_frames = jax.random.normal(
        k_frames, (B, T, D_VID), jnp.float32).astype(jnp.bfloat16)

    out = exmrd_forward(folded, fea_ocr, fea_caption, fea_comsense,
                        fea_causal, fea_frames)
    out = jax.block_until_ready(out)

    ref = exmrd_reference(params, fea_ocr, fea_caption, fea_comsense,
                          fea_causal, fea_frames.astype(jnp.float32))
    assert out.shape == (B, 2)
    assert jnp.allclose(out, ref, atol=1e-4, rtol=1e-4), (out, ref)

    print("KERNEL_OK")
</pallas_src>

<mosaic_0001>
module attributes {stable_mosaic.version = 11 : i64} {
  func.func @exmrd_kernel(%arg0: memref<2x8x1024xbf16, #tpu.memory_space<vmem>>, %arg1: memref<2x64xf32, #tpu.memory_space<vmem>>, %arg2: memref<2x64xf32, #tpu.memory_space<vmem>>, %arg3: memref<2x64xf32, #tpu.memory_space<vmem>>, %arg4: memref<2x64xf32, #tpu.memory_space<vmem>>, %arg5: memref<1288x2xf32, #tpu.memory_space<vmem>>, %arg6: memref<2x2xf32, #tpu.memory_space<vmem>>, %arg7: memref<2x1280xf32, #tpu.memory_space<vmem>>) attributes {dimension_semantics = [], scalar_prefetch = 0 : i64, scratch_operands = 1 : i64, tpu.core_type = #tpu.core_type<tc>} {
    %c0 = arith.constant 0 : index
    %c0_0 = arith.constant 0 : index
    %c0_1 = arith.constant 0 : index
    %0 = vector.load %arg0[%c0, %c0_0, %c0_1] : memref<2x8x1024xbf16, #tpu.memory_space<vmem>>, vector<2x8x1024xbf16>
    %1 = arith.extf %0 : vector<2x8x1024xbf16> to vector<2x8x1024xf32>
    %cst = arith.constant dense<0.000000e+00> : vector<2x1024xf32>
    %2 = vector.multi_reduction <add>, %1, %cst [1] : vector<2x8x1024xf32> to vector<2x1024xf32>
    %c0_2 = arith.constant 0 : index
    %c0_3 = arith.constant 0 : index
    %3 = vector.load %arg7[%c0_2, %c0_3] : memref<2x1280xf32, #tpu.memory_space<vmem>>, vector<2x1024xf32>
    tpu.vector_store %arg7[%c0_2, %c0_3], %2 {strides = array<i32>} : memref<2x1280xf32, #tpu.memory_space<vmem>>, vector<2x1024xf32>,
    %c0_4 = arith.constant 0 : index
    %c0_5 = arith.constant 0 : index
    %4 = vector.load %arg1[%c0_4, %c0_5] : memref<2x64xf32, #tpu.memory_space<vmem>>, vector<2x64xf32>
    %c0_6 = arith.constant 0 : index
    %c1024 = arith.constant 1024 : index
    %5 = vector.load %arg7[%c0_6, %c1024] : memref<2x1280xf32, #tpu.memory_space<vmem>>, vector<2x64xf32>
    tpu.vector_store %arg7[%c0_6, %c1024], %4 {strides = array<i32>} : memref<2x1280xf32, #tpu.memory_space<vmem>>, vector<2x64xf32>,
    %c0_7 = arith.constant 0 : index
    %c0_8 = arith.constant 0 : index
    %6 = vector.load %arg2[%c0_7, %c0_8] : memref<2x64xf32, #tpu.memory_space<vmem>>, vector<2x64xf32>
    %c0_9 = arith.constant 0 : index
    %c1088 = arith.constant 1088 : index
    %7 = vector.load %arg7[%c0_9, %c1088] : memref<2x1280xf32, #tpu.memory_space<vmem>>, vector<2x64xf32>
    tpu.vector_store %arg7[%c0_9, %c1088], %6 {strides = array<i32>} : memref<2x1280xf32, #tpu.memory_space<vmem>>, vector<2x64xf32>,
    %c0_10 = arith.constant 0 : index
    %c0_11 = arith.constant 0 : index
    %8 = vector.load %arg3[%c0_10, %c0_11] : memref<2x64xf32, #tpu.memory_space<vmem>>, vector<2x64xf32>
    %c0_12 = arith.constant 0 : index
    %c1152 = arith.constant 1152 : index
    %9 = vector.load %arg7[%c0_12, %c1152] : memref<2x1280xf32, #tpu.memory_space<vmem>>, vector<2x64xf32>
    tpu.vector_store %arg7[%c0_12, %c1152], %8 {strides = array<i32>} : memref<2x1280xf32, #tpu.memory_space<vmem>>, vector<2x64xf32>,
    %c0_13 = arith.constant 0 : index
    %c0_14 = arith.constant 0 : index
    %10 = vector.load %arg4[%c0_13, %c0_14] : memref<2x64xf32, #tpu.memory_space<vmem>>, vector<2x64xf32>
    %c0_15 = arith.constant 0 : index
    %c1216 = arith.constant 1216 : index
    %11 = vector.load %arg7[%c0_15, %c1216] : memref<2x1280xf32, #tpu.memory_space<vmem>>, vector<2x64xf32>
    tpu.vector_store %arg7[%c0_15, %c1216], %10 {strides = array<i32>} : memref<2x1280xf32, #tpu.memory_space<vmem>>, vector<2x64xf32>,
    %c0_16 = arith.constant 0 : index
    %c0_17 = arith.constant 0 : index
    %12 = vector.load %arg5[%c0_16, %c0_17] : memref<1288x2xf32, #tpu.memory_space<vmem>>, vector<1280x2xf32>
    %c1280 = arith.constant 1280 : index
    %c0_18 = arith.constant 0 : index
    %13 = vector.load %arg5[%c1280, %c0_18] : memref<1288x2xf32, #tpu.memory_space<vmem>>, vector<1x2xf32>
    %c0_19 = arith.constant 0 : index
    %c0_20 = arith.constant 0 : index
    %14 = vector.load %arg7[%c0_19, %c0_20] : memref<2x1280xf32, #tpu.memory_space<vmem>>, vector<2x1280xf32>
    %cst_21 = arith.constant dense<0.000000e+00> : vector<2x2xf32>
    %15 = tpu.matmul %14, %12, %cst_21 {dimension_numbers = #tpu.dot_dimension_numbers<[1], [0], [0], [1], [0, 0, 1, 1], [], []>} : vector<2x1280xf32>, vector<1280x2xf32>, vector<2x2xf32> -> vector<2x2xf32>
    %16 = vector.broadcast %13 : vector<1x2xf32> to vector<2x2xf32>
    %17 = arith.addf %15, %16 : vector<2x2xf32>
    %c0_22 = arith.constant 0 : index
    %c0_23 = arith.constant 0 : index
    %18 = vector.load %arg6[%c0_22, %c0_23] : memref<2x2xf32, #tpu.memory_space<vmem>>, vector<2x2xf32>
    tpu.vector_store %arg6[%c0_22, %c0_23], %17 {strides = array<i32>} : memref<2x2xf32, #tpu.memory_space<vmem>>, vector<2x2xf32>,
    return
  }
}

</mosaic_0001>

<llo_original>
// kernel: tpu_custom_call.1
$region0: #{tpu_custom_call.1}
  #allocation0 [shape = 'u32[]', space=smem, size = 0x4, offset = 0x4, fixed_abs, tag = 'smem constant byte address 0x4 - core index']
  #allocation1 [shape = 'u32[72,128]{1,0:T(1,128)}', space=vmem, size = 0x9000, scoped, tag = 'internal scratch']
  #allocation2 [shape = 'f32[2,1280]{1,0:T(2,128)}', space=vmem, size = 0x2800, scoped, tag = 'scratch operand']
  %s0 = inlined_call_operand.vmem [shape: bf16[2,8,1024], index: 0, kind: input, shape index: {}]
  %s1 = inlined_call_operand.vmem [shape: f32[2,64], index: 1, kind: input, shape index: {}]
  %s2 = inlined_call_operand.vmem [shape: f32[2,64], index: 2, kind: input, shape index: {}]
  %s3 = inlined_call_operand.vmem [shape: f32[2,64], index: 3, kind: input, shape index: {}]
  %s4 = inlined_call_operand.vmem [shape: f32[2,64], index: 4, kind: input, shape index: {}]
  %s5 = inlined_call_operand.vmem [shape: f32[1288,2], index: 5, kind: input, shape index: {}]
  %s6 = inlined_call_operand.hbm [shape: f32[2,2], index: 6, kind: output, shape index: {}]
  %s7 = sld [smem:[#allocation0]]
  $region34: #{tpu_custom_call.1} parent=0
    _
  %s9 = ssub.s32 1, %s7
  %s10 = scalar_select 0, %s9, %s7
  $region1: #{tpu_custom_call.1} parent=0
    #allocation3 [shape = 'u8[1024]{0}', space=vmem, size = 0x400, scoped, tag = 'output window, operand 0, single buffered']
    #allocation4 [shape = 's32[1]{0}', space=sflag, size = 0x4, scoped, tag = 'scoped memory for tpu_custom_call.1']
    %11 = vsyncpa [#allocation4], 0
    // Predicated region
    $region2: #{tpu_custom_call.1} parent=1 // pred_check
      _
    $region3: #{tpu_custom_call.1} parent=1 // pred_check_branch
      %13 = sbr.rel (0) target = $region5
    $region4: #{tpu_custom_call.1} parent=1 // pred_region
      _
    $region5: #{tpu_custom_call.1} parent=1 // pred_fallthru
      _
    // Predicated region
    $region6: #{tpu_custom_call.1} parent=1 // pred_check
      _
    $region7: #{tpu_custom_call.1} parent=1 // pred_check_branch
      %15 = sbr.rel (0) target = $region9
    $region8: #{tpu_custom_call.1} parent=1 // pred_region
      _
    $region9: #{tpu_custom_call.1} parent=1 // pred_fallthru
      _
    // Predicated region
    $region10: #{tpu_custom_call.1} parent=1 // pred_check
      _
    $region11: #{tpu_custom_call.1} parent=1 // pred_check_branch
      %17 = sbr.rel (0) target = $region13
    $region12: #{tpu_custom_call.1} parent=1 // pred_region
      _
    $region13: #{tpu_custom_call.1} parent=1 // pred_fallthru
      _
    // Predicated region
    $region14: #{tpu_custom_call.1} parent=1 // pred_check
      _
    $region15: #{tpu_custom_call.1} parent=1 // pred_check_branch
      %19 = sbr.rel (0) target = $region17
    $region16: #{tpu_custom_call.1} parent=1 // pred_region
      _
    $region17: #{tpu_custom_call.1} parent=1 // pred_fallthru
      _
    // Predicated region
    $region18: #{tpu_custom_call.1} parent=1 // pred_check
      _
    $region19: #{tpu_custom_call.1} parent=1 // pred_check_branch
      %21 = sbr.rel (0) target = $region21
    $region20: #{tpu_custom_call.1} parent=1 // pred_region
      _
    $region21: #{tpu_custom_call.1} parent=1 // pred_fallthru
      _
    // Predicated region
    $region22: #{tpu_custom_call.1} parent=1 // pred_check
      _
    $region23: #{tpu_custom_call.1} parent=1 // pred_check_branch
      %23 = sbr.rel (0) target = $region25
    $region24: #{tpu_custom_call.1} parent=1 // pred_region
      _
    $region25: #{tpu_custom_call.1} parent=1 // pred_fallthru
      _
    %v24 = vld [vmem:[%s0] sm:$0xff]
    %v25 = vld [vmem:[%s0 + $0x8] sm:$0xff]
    %v26 = vld [vmem:[%s0 + $0x10] sm:$0xff]
    %v27 = vld [vmem:[%s0 + $0x18] sm:$0xff]
    %v28 = vld [vmem:[%s0 + $0x20] sm:$0xff]
    %v29 = vld [vmem:[%s0 + $0x28] sm:$0xff]
    %v30 = vld [vmem:[%s0 + $0x30] sm:$0xff]
    %v31 = vld [vmem:[%s0 + $0x38] sm:$0xff]
    %v32 = vunpack.c.l.bf16 %v24
    %v33 = vunpack.c.h.bf16 %v24
    %v34 = vunpack.c.l.bf16 %v25
    %v35 = vunpack.c.h.bf16 %v25
    %v36 = vunpack.c.l.bf16 %v26
    %v37 = vunpack.c.h.bf16 %v26
    %v38 = vunpack.c.l.bf16 %v27
    %v39 = vunpack.c.h.bf16 %v27
    %v40 = vunpack.c.l.bf16 %v28
    %v41 = vunpack.c.h.bf16 %v28
    %v42 = vunpack.c.l.bf16 %v29
    %v43 = vunpack.c.h.bf16 %v29
    %v44 = vunpack.c.l.bf16 %v30
    %v45 = vunpack.c.h.bf16 %v30
    %v46 = vunpack.c.l.bf16 %v31
    %v47 = vunpack.c.h.bf16 %v31
    %v48 = vrot.slane %v32, 4
    %v49 = vadd.f32 %v32, %v48
    %v50 = vrot.slane %v49, 2
    %v51 = vadd.f32 %v49, %v50
    %v52 = vrot.slane %v51, 1
    %v53 = vadd.f32 %v51, %v52
    %v54 = vrot.slane %v33, 4
    %v55 = vadd.f32 %v33, %v54
    %v56 = vrot.slane %v55, 2
    %v57 = vadd.f32 %v55, %v56
    %v58 = vrot.slane %v57, 1
    %v59 = vadd.f32 %v57, %v58
    %v60 = vrot.slane %v34, 4
    %v61 = vadd.f32 %v34, %v60
    %v62 = vrot.slane %v61, 2
    %v63 = vadd.f32 %v61, %v62
    %v64 = vrot.slane %v63, 1
    %v65 = vadd.f32 %v63, %v64
    %v66 = vrot.slane %v35, 4
    %v67 = vadd.f32 %v35, %v66
    %v68 = vrot.slane %v67, 2
    %v69 = vadd.f32 %v67, %v68
    %v70 = vrot.slane %v69, 1
    %v71 = vadd.f32 %v69, %v70
    %v72 = vrot.slane %v36, 4
    %v73 = vadd.f32 %v36, %v72
    %v74 = vrot.slane %v73, 2
    %v75 = vadd.f32 %v73, %v74
    %v76 = vrot.slane %v75, 1
    %v77 = vadd.f32 %v75, %v76
    %v78 = vrot.slane %v37, 4
    %v79 = vadd.f32 %v37, %v78
    %v80 = vrot.slane %v79, 2
    %v81 = vadd.f32 %v79, %v80
    %v82 = vrot.slane %v81, 1
    %v83 = vadd.f32 %v81, %v82
    %v84 = vrot.slane %v38, 4
    %v85 = vadd.f32 %v38, %v84
    %v86 = vrot.slane %v85, 2
    %v87 = vadd.f32 %v85, %v86
    %v88 = vrot.slane %v87, 1
    %v89 = vadd.f32 %v87, %v88
    %v90 = vrot.slane %v39, 4
    %v91 = vadd.f32 %v39, %v90
    %v92 = vrot.slane %v91, 2
    %v93 = vadd.f32 %v91, %v92
    %v94 = vrot.slane %v93, 1
    %v95 = vadd.f32 %v93, %v94
    %v96 = vrot.slane %v40, 4
    %v97 = vadd.f32 %v40, %v96
    %v98 = vrot.slane %v97, 2
    %v99 = vadd.f32 %v97, %v98
    %v100 = vrot.slane %v99, 1
    %v101 = vadd.f32 %v99, %v100
    %v102 = vrot.slane %v41, 4
    %v103 = vadd.f32 %v41, %v102
    %v104 = vrot.slane %v103, 2
    %v105 = vadd.f32 %v103, %v104
    %v106 = vrot.slane %v105, 1
    %v107 = vadd.f32 %v105, %v106
    %v108 = vrot.slane %v42, 4
    %v109 = vadd.f32 %v42, %v108
    %v110 = vrot.slane %v109, 2
    %v111 = vadd.f32 %v109, %v110
    %v112 = vrot.slane %v111, 1
    %v113 = vadd.f32 %v111, %v112
    %v114 = vrot.slane %v43, 4
    %v115 = vadd.f32 %v43, %v114
    %v116 = vrot.slane %v115, 2
    %v117 = vadd.f32 %v115, %v116
    %v118 = vrot.slane %v117, 1
    %v119 = vadd.f32 %v117, %v118
    %v120 = vrot.slane %v44, 4
    %v121 = vadd.f32 %v44, %v120
    %v122 = vrot.slane %v121, 2
    %v123 = vadd.f32 %v121, %v122
    %v124 = vrot.slane %v123, 1
    %v125 = vadd.f32 %v123, %v124
    %v126 = vrot.slane %v45, 4
    %v127 = vadd.f32 %v45, %v126
    %v128 = vrot.slane %v127, 2
    %v129 = vadd.f32 %v127, %v128
    %v130 = vrot.slane %v129, 1
    %v131 = vadd.f32 %v129, %v130
    %v132 = vrot.slane %v46, 4
    %v133 = vadd.f32 %v46, %v132
    %v134 = vrot.slane %v133, 2
    %v135 = vadd.f32 %v133, %v134
    %v136 = vrot.slane %v135, 1
    %v137 = vadd.f32 %v135, %v136
    %v138 = vrot.slane %v47, 4
    %v139 = vadd.f32 %v47, %v138
    %v140 = vrot.slane %v139, 2
    %v141 = vadd.f32 %v139, %v140
    %v142 = vrot.slane %v141, 1
    %v143 = vadd.f32 %v141, %v142
    %v160 = vrot.slane %v59, 6
    %v161 = vrot.slane %v65, 4
    %v162 = vrot.slane %v71, 2
    %v163 = vrot.slane %v83, 6
    %v164 = vrot.slane %v89, 4
    %v165 = vrot.slane %v95, 2
    %v166 = vrot.slane %v107, 6
    %v167 = vrot.slane %v113, 4
    %v168 = vrot.slane %v119, 2
    %v169 = vrot.slane %v131, 6
    %v170 = vrot.slane %v137, 4
    %v171 = vrot.slane %v143, 2
    %vm172 = vcmask 1041408
    %v173 = vsel %vm172, %v53, %v160
    %vm174 = vcmask 1045508
    %v175 = vsel %vm174, %v161, %v162
    %vm176 = vcmask 1043456
    %v177 = vsel %vm176, %v173, %v175
    %v178 = vsel %vm172, %v77, %v163
    %v179 = vsel %vm174, %v164, %v165
    %v180 = vsel %vm176, %v178, %v179
    %v181 = vsel %vm172, %v101, %v166
    %v182 = vsel %vm174, %v167, %v168
    %v183 = vsel %vm176, %v181, %v182
    %v184 = vsel %vm172, %v125, %v169
    %v185 = vsel %vm174, %v170, %v171
    %v186 = vsel %vm176, %v184, %v185
    %vm187 = vcmask 1044484
    %v188 = vsel %vm187, %v177, %v177
    %vm189 = vcmask 1046534
    %v190 = vsel %vm189, %v177, %v188
    %v191 = vrot.slane %v183, 7
    %vm192 = vcmask 1041409
    %v193 = vsel %vm192, %v191, %v190
    %vm194 = vcmask 1043459
    %v195 = vsel %vm194, %v191, %v193
    %vm196 = vcmask 1045509
    %v197 = vsel %vm196, %v191, %v195
    %vm198 = vcmask 1047559
    %v199 = vsel %vm198, %v191, %v197
    %v200 = vsel %vm187, %v180, %v180
    %v201 = vsel %vm189, %v180, %v200
    %v202 = vrot.slane %v186, 7
    %v203 = vsel %vm192, %v202, %v201
    %v204 = vsel %vm194, %v202, %v203
    %v205 = vsel %vm196, %v202, %v204
    %v206 = vsel %vm198, %v202, %v205
    %209 = vst [vmem:[#allocation2] sm:$0xff] %v199
    %210 = vst [vmem:[#allocation2 + $0x8] sm:$0xff] %v206
    %v211 = vld [vmem:[%s1] sm:$0x3]
    %vm212 = vcmask 517120
    %213 = vst.msk [vmem:[#allocation2 + $0x10] sm:$0x3] %vm212, %v211
    %v214 = vld [vmem:[%s2] sm:$0x3]
    %216 = vrot.lane.b32.xlu0 %v214, 64
    %v217 = vpop.permute.xlu0 %216
    %vm219 = vcmask 1041920
    %220 = vst.msk [vmem:[#allocation2 + $0x10] sm:$0x3] %vm219, %v217
    %v221 = vld [vmem:[%s3] sm:$0x3]
    %222 = vst.msk [vmem:[#allocation2 + $0x12] sm:$0x3] %vm212, %v221
    %v223 = vld [vmem:[%s4] sm:$0x3]
    %225 = vrot.lane.b32.xlu0 %v223, 64
    %v226 = vpop.permute.xlu0 %225
    %228 = vst.msk [vmem:[#allocation2 + $0x12] sm:$0x3] %vm219, %v226
    %v229 = vld [vmem:[%s5] sm:$0xff]
    %v230 = vld [vmem:[%s5 + $0x8] sm:$0xff]
    %v231 = vld [vmem:[%s5 + $0x10] sm:$0xff]
    %v232 = vld [vmem:[%s5 + $0x18] sm:$0xff]
    %v233 = vld [vmem:[%s5 + $0x20] sm:$0xff]
    %v234 = vld [vmem:[%s5 + $0x28] sm:$0xff]
    %v235 = vld [vmem:[%s5 + $0x30] sm:$0xff]
    %v236 = vld [vmem:[%s5 + $0x38] sm:$0xff]
    %v237 = vld [vmem:[%s5 + $0x40] sm:$0xff]
    %v238 = vld [vmem:[%s5 + $0x48] sm:$0xff]
    %v239 = vld [vmem:[%s5 + $0x50] sm:$0xff]
    %v240 = vld [vmem:[%s5 + $0x58] sm:$0xff]
    %v241 = vld [vmem:[%s5 + $0x60] sm:$0xff]
    %v242 = vld [vmem:[%s5 + $0x68] sm:$0xff]
    %v243 = vld [vmem:[%s5 + $0x70] sm:$0xff]
    %v244 = vld [vmem:[%s5 + $0x78] sm:$0xff]
    %v245 = vld [vmem:[%s5 + $0x80] sm:$0xff]
    %v246 = vld [vmem:[%s5 + $0x88] sm:$0xff]
    %v247 = vld [vmem:[%s5 + $0x90] sm:$0xff]
    %v248 = vld [vmem:[%s5 + $0x98] sm:$0xff]
    %v249 = vld [vmem:[%s5 + $0xa0] sm:$0xff]
    %v250 = vld [vmem:[%s5 + $0xa8] sm:$0xff]
    %v251 = vld [vmem:[%s5 + $0xb0] sm:$0xff]
    %v252 = vld [vmem:[%s5 + $0xb8] sm:$0xff]
    %v253 = vld [vmem:[%s5 + $0xc0] sm:$0xff]
    %v254 = vld [vmem:[%s5 + $0xc8] sm:$0xff]
    %v255 = vld [vmem:[%s5 + $0xd0] sm:$0xff]
    %v256 = vld [vmem:[%s5 + $0xd8] sm:$0xff]
    %v257 = vld [vmem:[%s5 + $0xe0] sm:$0xff]
    %v258 = vld [vmem:[%s5 + $0xe8] sm:$0xff]
    %v259 = vld [vmem:[%s5 + $0xf0] sm:$0xff]
    %v260 = vld [vmem:[%s5 + $0xf8] sm:$0xff]
    %v261 = vld [vmem:[%s5 + $0x100] sm:$0xff]
    %v262 = vld [vmem:[%s5 + $0x108] sm:$0xff]
    %v263 = vld [vmem:[%s5 + $0x110] sm:$0xff]
    %v264 = vld [vmem:[%s5 + $0x118] sm:$0xff]
    %v265 = vld [vmem:[%s5 + $0x120] sm:$0xff]
    %v266 = vld [vmem:[%s5 + $0x128] sm:$0xff]
    %v267 = vld [vmem:[%s5 + $0x130] sm:$0xff]
    %v268 = vld [vmem:[%s5 + $0x138] sm:$0xff]
    %v269 = vld [vmem:[%s5 + $0x140] sm:$0xff]
    %v270 = vld [vmem:[%s5 + $0x148] sm:$0xff]
    %v271 = vld [vmem:[%s5 + $0x150] sm:$0xff]
    %v272 = vld [vmem:[%s5 + $0x158] sm:$0xff]
    %v273 = vld [vmem:[%s5 + $0x160] sm:$0xff]
    %v274 = vld [vmem:[%s5 + $0x168] sm:$0xff]
    %v275 = vld [vmem:[%s5 + $0x170] sm:$0xff]
    %v276 = vld [vmem:[%s5 + $0x178] sm:$0xff]
    %v277 = vld [vmem:[%s5 + $0x180] sm:$0xff]
    %v278 = vld [vmem:[%s5 + $0x188] sm:$0xff]
    %v279 = vld [vmem:[%s5 + $0x190] sm:$0xff]
    %v280 = vld [vmem:[%s5 + $0x198] sm:$0xff]
    %v281 = vld [vmem:[%s5 + $0x1a0] sm:$0xff]
    %v282 = vld [vmem:[%s5 + $0x1a8] sm:$0xff]
    %v283 = vld [vmem:[%s5 + $0x1b0] sm:$0xff]
    %v284 = vld [vmem:[%s5 + $0x1b8] sm:$0xff]
    %v285 = vld [vmem:[%s5 + $0x1c0] sm:$0xff]
    %v286 = vld [vmem:[%s5 + $0x1c8] sm:$0xff]
    %v287 = vld [vmem:[%s5 + $0x1d0] sm:$0xff]
    %v288 = vld [vmem:[%s5 + $0x1d8] sm:$0xff]
    %v289 = vld [vmem:[%s5 + $0x1e0] sm:$0xff]
    %v290 = vld [vmem:[%s5 + $0x1e8] sm:$0xff]
    %v291 = vld [vmem:[%s5 + $0x1f0] sm:$0xff]
    %v292 = vld [vmem:[%s5 + $0x1f8] sm:$0xff]
    %v293 = vld [vmem:[%s5 + $0x200] sm:$0xff]
    %v294 = vld [vmem:[%s5 + $0x208] sm:$0xff]
    %v295 = vld [vmem:[%s5 + $0x210] sm:$0xff]
    %v296 = vld [vmem:[%s5 + $0x218] sm:$0xff]
    %v297 = vld [vmem:[%s5 + $0x220] sm:$0xff]
    %v298 = vld [vmem:[%s5 + $0x228] sm:$0xff]
    %v299 = vld [vmem:[%s5 + $0x230] sm:$0xff]
    %v300 = vld [vmem:[%s5 + $0x238] sm:$0xff]
    %v301 = vld [vmem:[%s5 + $0x240] sm:$0xff]
    %v302 = vld [vmem:[%s5 + $0x248] sm:$0xff]
    %v303 = vld [vmem:[%s5 + $0x250] sm:$0xff]
    %v304 = vld [vmem:[%s5 + $0x258] sm:$0xff]
    %v305 = vld [vmem:[%s5 + $0x260] sm:$0xff]
    %v306 = vld [vmem:[%s5 + $0x268] sm:$0xff]
    %v307 = vld [vmem:[%s5 + $0x270] sm:$0xff]
    %v308 = vld [vmem:[%s5 + $0x278] sm:$0xff]
    %v309 = vld [vmem:[%s5 + $0x280] sm:$0xff]
    %v310 = vld [vmem:[%s5 + $0x288] sm:$0xff]
    %v311 = vld [vmem:[%s5 + $0x290] sm:$0xff]
    %v312 = vld [vmem:[%s5 + $0x298] sm:$0xff]
    %v313 = vld [vmem:[%s5 + $0x2a0] sm:$0xff]
    %v314 = vld [vmem:[%s5 + $0x2a8] sm:$0xff]
    %v315 = vld [vmem:[%s5 + $0x2b0] sm:$0xff]
    %v316 = vld [vmem:[%s5 + $0x2b8] sm:$0xff]
    %v317 = vld [vmem:[%s5 + $0x2c0] sm:$0xff]
    %v318 = vld [vmem:[%s5 + $0x2c8] sm:$0xff]
    %v319 = vld [vmem:[%s5 + $0x2d0] sm:$0xff]
    %v320 = vld [vmem:[%s5 + $0x2d8] sm:$0xff]
    %v321 = vld [vmem:[%s5 + $0x2e0] sm:$0xff]
    %v322 = vld [vmem:[%s5 + $0x2e8] sm:$0xff]
    %v323 = vld [vmem:[%s5 + $0x2f0] sm:$0xff]
    %v324 = vld [vmem:[%s5 + $0x2f8] sm:$0xff]
    %v325 = vld [vmem:[%s5 + $0x300] sm:$0xff]
    %v326 = vld [vmem:[%s5 + $0x308] sm:$0xff]
    %v327 = vld [vmem:[%s5 + $0x310] sm:$0xff]
    %v328 = vld [vmem:[%s5 + $0x318] sm:$0xff]
    %v329 = vld [vmem:[%s5 + $0x320] sm:$0xff]
    %v330 = vld [vmem:[%s5 + $0x328] sm:$0xff]
    %v331 = vld [vmem:[%s5 + $0x330] sm:$0xff]
    %v332 = vld [vmem:[%s5 + $0x338] sm:$0xff]
    %v333 = vld [vmem:[%s5 + $0x340] sm:$0xff]
    %v334 = vld [vmem:[%s5 + $0x348] sm:$0xff]
    %v335 = vld [vmem:[%s5 + $0x350] sm:$0xff]
    %v336 = vld [vmem:[%s5 + $0x358] sm:$0xff]
    %v337 = vld [vmem:[%s5 + $0x360] sm:$0xff]
    %v338 = vld [vmem:[%s5 + $0x368] sm:$0xff]
    %v339 = vld [vmem:[%s5 + $0x370] sm:$0xff]
    %v340 = vld [vmem:[%s5 + $0x378] sm:$0xff]
    %v341 = vld [vmem:[%s5 + $0x380] sm:$0xff]
    %v342 = vld [vmem:[%s5 + $0x388] sm:$0xff]
    %v343 = vld [vmem:[%s5 + $0x390] sm:$0xff]
    %v344 = vld [vmem:[%s5 + $0x398] sm:$0xff]
    %v345 = vld [vmem:[%s5 + $0x3a0] sm:$0xff]
    %v346 = vld [vmem:[%s5 + $0x3a8] sm:$0xff]
    %v347 = vld [vmem:[%s5 + $0x3b0] sm:$0xff]
    %v348 = vld [vmem:[%s5 + $0x3b8] sm:$0xff]
    %v349 = vld [vmem:[%s5 + $0x3c0] sm:$0xff]
    %v350 = vld [vmem:[%s5 + $0x3c8] sm:$0xff]
    %v351 = vld [vmem:[%s5 + $0x3d0] sm:$0xff]
    %v352 = vld [vmem:[%s5 + $0x3d8] sm:$0xff]
    %v353 = vld [vmem:[%s5 + $0x3e0] sm:$0xff]
    %v354 = vld [vmem:[%s5 + $0x3e8] sm:$0xff]
    %v355 = vld [vmem:[%s5 + $0x3f0] sm:$0xff]
    %v356 = vld [vmem:[%s5 + $0x3f8] sm:$0xff]
    %v357 = vld [vmem:[%s5 + $0x400] sm:$0xff]
    %v358 = vld [vmem:[%s5 + $0x408] sm:$0xff]
    %v359 = vld [vmem:[%s5 + $0x410] sm:$0xff]
    %v360 = vld [vmem:[%s5 + $0x418] sm:$0xff]
    %v361 = vld [vmem:[%s5 + $0x420] sm:$0xff]
    %v362 = vld [vmem:[%s5 + $0x428] sm:$0xff]
    %v363 = vld [vmem:[%s5 + $0x430] sm:$0xff]
    %v364 = vld [vmem:[%s5 + $0x438] sm:$0xff]
    %v365 = vld [vmem:[%s5 + $0x440] sm:$0xff]
    %v366 = vld [vmem:[%s5 + $0x448] sm:$0xff]
    %v367 = vld [vmem:[%s5 + $0x450] sm:$0xff]
    %v368 = vld [vmem:[%s5 + $0x458] sm:$0xff]
    %v369 = vld [vmem:[%s5 + $0x460] sm:$0xff]
    %v370 = vld [vmem:[%s5 + $0x468] sm:$0xff]
    %v371 = vld [vmem:[%s5 + $0x470] sm:$0xff]
    %v372 = vld [vmem:[%s5 + $0x478] sm:$0xff]
    %v373 = vld [vmem:[%s5 + $0x480] sm:$0xff]
    %v374 = vld [vmem:[%s5 + $0x488] sm:$0xff]
    %v375 = vld [vmem:[%s5 + $0x490] sm:$0xff]
    %v376 = vld [vmem:[%s5 + $0x498] sm:$0xff]
    %v377 = vld [vmem:[%s5 + $0x4a0] sm:$0xff]
    %v378 = vld [vmem:[%s5 + $0x4a8] sm:$0xff]
    %v379 = vld [vmem:[%s5 + $0x4b0] sm:$0xff]
    %v380 = vld [vmem:[%s5 + $0x4b8] sm:$0xff]
    %v381 = vld [vmem:[%s5 + $0x4c0] sm:$0xff]
    %v382 = vld [vmem:[%s5 + $0x4c8] sm:$0xff]
    %v383 = vld [vmem:[%s5 + $0x4d0] sm:$0xff]
    %v384 = vld [vmem:[%s5 + $0x4d8] sm:$0xff]
    %v385 = vld [vmem:[%s5 + $0x4e0] sm:$0xff]
    %v386 = vld [vmem:[%s5 + $0x4e8] sm:$0xff]
    %v387 = vld [vmem:[%s5 + $0x4f0] sm:$0xff]
    %v388 = vld [vmem:[%s5 + $0x4f8] sm:$0xff]
    %v389 = vld [vmem:[%s5 + $0x500] sm:$0x1]
    %v390 = vld [vmem:[#allocation2] sm:$0xff]
    %v391 = vld [vmem:[#allocation2 + $0x8] sm:$0xff]
    %v392 = vld [vmem:[#allocation2 + $0x10] sm:$0xf]
    %v393 = vperm.slane %v389, 0
    %397 = vst [vmem:[#allocation1] ss:$4 sm:$0xff] %v390
    %s398 = scalar_lea.vmem [#allocation1], 32
    %399 = vst [vmem:[%s398] ss:$4 sm:$0xff] %v391
    %v400 = vld.sshfl [vmem:[#allocation1] sm:$0xff pattern:$0x73625140]
    %v401 = vld.sshfl [vmem:[#allocation1 + $0x8] sm:$0xff pattern:$0x73625140]
    %v402 = vld.sshfl [vmem:[#allocation1 + $0x10] sm:$0xff pattern:$0x73625140]
    %v403 = vld.sshfl [vmem:[#allocation1 + $0x18] sm:$0xff pattern:$0x73625140]
    %v404 = vld.sshfl [vmem:[#allocation1 + $0x20] sm:$0xff pattern:$0x73625140]
    %v405 = vld.sshfl [vmem:[#allocation1 + $0x28] sm:$0xff pattern:$0x73625140]
    %v406 = vld.sshfl [vmem:[#allocation1 + $0x30] sm:$0xff pattern:$0x73625140]
    %v407 = vld.sshfl [vmem:[#allocation1 + $0x38] sm:$0xff pattern:$0x73625140]
    %408 = vst [vmem:[#allocation1] ss:$4 sm:$0xff] %v392
    %v409 = vld.sshfl [vmem:[#allocation1] sm:$0xff pattern:$0x73625140]
    %v410 = vld.sshfl [vmem:[#allocation1 + $0x8] sm:$0xff pattern:$0x73625140]
    %421 = vmatpush.msra.mxu0 %v244
    %422 = vmatpush.msra.mxu0 %v243
    %423 = vmatpush.msra.mxu0 %v242
    %424 = vmatpush.msra.mxu0 %v241
    %425 = vmatpush.msra.mxu0 %v240
    %426 = vmatpush.msra.mxu0 %v239
    %427 = vmatpush.msra.mxu0 %v238
    %428 = vmatpush.msra.mxu0 %v237
    %429 = vmatpush.msra.mxu0 %v236
    %430 = vmatpush.msra.mxu0 %v235
    %431 = vmatpush.msra.mxu0 %v234
    %432 = vmatpush.msra.mxu0 %v233
    %433 = vmatpush.msra.mxu0 %v232
    %434 = vmatpush.msra.mxu0 %v231
    %435 = vmatpush.msra.mxu0 %v230
    %436 = vmatpush.msra.mxu0 %v229
    %437 = vmatmul.f32.gmra.mxu0 %v400
    %v438 = vpop.f32.mrf.mxu0
    %v439 = vadd.f32 %v393, %v438
    %440 = vdwg.mxu0
    %441 = vmatpush.msra.mxu0 %v260
    %442 = vmatpush.msra.mxu0 %v259
    %443 = vmatpush.msra.mxu0 %v258
    %444 = vmatpush.msra.mxu0 %v257
    %445 = vmatpush.msra.mxu0 %v256
    %446 = vmatpush.msra.mxu0 %v255
    %447 = vmatpush.msra.mxu0 %v254
    %448 = vmatpush.msra.mxu0 %v253
    %449 = vmatpush.msra.mxu0 %v252
    %450 = vmatpush.msra.mxu0 %v251
    %451 = vmatpush.msra.mxu0 %v250
    %452 = vmatpush.msra.mxu0 %v249
    %453 = vmatpush.msra.mxu0 %v248
    %454 = vmatpush.msra.mxu0 %v247
    %455 = vmatpush.msra.mxu0 %v246
    %456 = vmatpush.msra.mxu0 %v245
    %457 = vmatmul.f32.gmra.mxu0 %v401
    %v458 = vpop.f32.mrf.mxu0
    %v459 = vadd.f32 %v439, %v458
    %460 = vdwg.mxu0
    %461 = vmatpush.msra.mxu0 %v276
    %462 = vmatpush.msra.mxu0 %v275
    %463 = vmatpush.msra.mxu0 %v274
    %464 = vmatpush.msra.mxu0 %v273
    %465 = vmatpush.msra.mxu0 %v272
    %466 = vmatpush.msra.mxu0 %v271
    %467 = vmatpush.msra.mxu0 %v270
    %468 = vmatpush.msra.mxu0 %v269
    %469 = vmatpush.msra.mxu0 %v268
    %470 = vmatpush.msra.mxu0 %v267
    %471 = vmatpush.msra.mxu0 %v266
    %472 = vmatpush.msra.mxu0 %v265
    %473 = vmatpush.msra.mxu0 %v264
    %474 = vmatpush.msra.mxu0 %v263
    %475 = vmatpush.msra.mxu0 %v262
    %476 = vmatpush.msra.mxu0 %v261
    %477 = vmatmul.f32.gmra.mxu0 %v402
    %v478 = vpop.f32.mrf.mxu0
    %v479 = vadd.f32 %v459, %v478
    %480 = vdwg.mxu0
    %481 = vmatpush.msra.mxu0 %v292
    %482 = vmatpush.msra.mxu0 %v291
    %483 = vmatpush.msra.mxu0 %v290
    %484 = vmatpush.msra.mxu0 %v289
    %485 = vmatpush.msra.mxu0 %v288
    %486 = vmatpush.msra.mxu0 %v287
    %487 = vmatpush.msra.mxu0 %v286
    %488 = vmatpush.msra.mxu0 %v285
    %489 = vmatpush.msra.mxu0 %v284
    %490 = vmatpush.msra.mxu0 %v283
    %491 = vmatpush.msra.mxu0 %v282
    %492 = vmatpush.msra.mxu0 %v281
    %493 = vmatpush.msra.mxu0 %v280
    %494 = vmatpush.msra.mxu0 %v279
    %495 = vmatpush.msra.mxu0 %v278
    %496 = vmatpush.msra.mxu0 %v277
    %497 = vmatmul.f32.gmra.mxu0 %v403
    %v498 = vpop.f32.mrf.mxu0
    %v499 = vadd.f32 %v479, %v498
    %500 = vdwg.mxu0
    %501 = vmatpush.msra.mxu0 %v308
    %502 = vmatpush.msra.mxu0 %v307
    %503 = vmatpush.msra.mxu0 %v306
    %504 = vmatpush.msra.mxu0 %v305
    %505 = vmatpush.msra.mxu0 %v304
    %506 = vmatpush.msra.mxu0 %v303
    %507 = vmatpush.msra.mxu0 %v302
    %508 = vmatpush.msra.mxu0 %v301
    %509 = vmatpush.msra.mxu0 %v300
    %510 = vmatpush.msra.mxu0 %v299
    %511 = vmatpush.msra.mxu0 %v298
    %512 = vmatpush.msra.mxu0 %v297
    %513 = vmatpush.msra.mxu0 %v296
    %514 = vmatpush.msra.mxu0 %v295
    %515 = vmatpush.msra.mxu0 %v294
    %516 = vmatpush.msra.mxu0 %v293
    %517 = vmatmul.f32.gmra.mxu0 %v404
    %v518 = vpop.f32.mrf.mxu0
    %v519 = vadd.f32 %v499, %v518
    %520 = vdwg.mxu0
    %521 = vmatpush.msra.mxu0 %v324
    %522 = vmatpush.msra.mxu0 %v323
    %523 = vmatpush.msra.mxu0 %v322
    %524 = vmatpush.msra.mxu0 %v321
    %525 = vmatpush.msra.mxu0 %v320
    %526 = vmatpush.msra.mxu0 %v319
    %527 = vmatpush.msra.mxu0 %v318
    %528 = vmatpush.msra.mxu0 %v317
    %529 = vmatpush.msra.mxu0 %v316
    %530 = vmatpush.msra.mxu0 %v315
    %531 = vmatpush.msra.mxu0 %v314
    %532 = vmatpush.msra.mxu0 %v313
    %533 = vmatpush.msra.mxu0 %v312
    %534 = vmatpush.msra.mxu0 %v311
    %535 = vmatpush.msra.mxu0 %v310
    %536 = vmatpush.msra.mxu0 %v309
    %537 = vmatmul.f32.gmra.mxu0 %v405
    %v538 = vpop.f32.mrf.mxu0
    %v539 = vadd.f32 %v519, %v538
    %540 = vdwg.mxu0
    %541 = vmatpush.msra.mxu0 %v340
    %542 = vmatpush.msra.mxu0 %v339
    %543 = vmatpush.msra.mxu0 %v338
    %544 = vmatpush.msra.mxu0 %v337
    %545 = vmatpush.msra.mxu0 %v336
    %546 = vmatpush.msra.mxu0 %v335
    %547 = vmatpush.msra.mxu0 %v334
    %548 = vmatpush.msra.mxu0 %v333
    %549 = vmatpush.msra.mxu0 %v332
    %550 = vmatpush.msra.mxu0 %v331
    %551 = vmatpush.msra.mxu0 %v330
    %552 = vmatpush.msra.mxu0 %v329
    %553 = vmatpush.msra.mxu0 %v328
    %554 = vmatpush.msra.mxu0 %v327
    %555 = vmatpush.msra.mxu0 %v326
    %556 = vmatpush.msra.mxu0 %v325
    %557 = vmatmul.f32.gmra.mxu0 %v406
    %v558 = vpop.f32.mrf.mxu0
    %v559 = vadd.f32 %v539, %v558
    %560 = vdwg.mxu0
    %561 = vmatpush.msra.mxu0 %v356
    %562 = vmatpush.msra.mxu0 %v355
    %563 = vmatpush.msra.mxu0 %v354
    %564 = vmatpush.msra.mxu0 %v353
    %565 = vmatpush.msra.mxu0 %v352
    %566 = vmatpush.msra.mxu0 %v351
    %567 = vmatpush.msra.mxu0 %v350
    %568 = vmatpush.msra.mxu0 %v349
    %569 = vmatpush.msra.mxu0 %v348
    %570 = vmatpush.msra.mxu0 %v347
    %571 = vmatpush.msra.mxu0 %v346
    %572 = vmatpush.msra.mxu0 %v345
    %573 = vmatpush.msra.mxu0 %v344
    %574 = vmatpush.msra.mxu0 %v343
    %575 = vmatpush.msra.mxu0 %v342
    %576 = vmatpush.msra.mxu0 %v341
    %577 = vmatmul.f32.gmra.mxu0 %v407
    %v578 = vpop.f32.mrf.mxu0
    %v579 = vadd.f32 %v559, %v578
    %580 = vdwg.mxu0
    %581 = vmatpush.msra.mxu0 %v372
    %582 = vmatpush.msra.mxu0 %v371
    %583 = vmatpush.msra.mxu0 %v370
    %584 = vmatpush.msra.mxu0 %v369
    %585 = vmatpush.msra.mxu0 %v368
    %586 = vmatpush.msra.mxu0 %v367
    %587 = vmatpush.msra.mxu0 %v366
    %588 = vmatpush.msra.mxu0 %v365
    %589 = vmatpush.msra.mxu0 %v364
    %590 = vmatpush.msra.mxu0 %v363
    %591 = vmatpush.msra.mxu0 %v362
    %592 = vmatpush.msra.mxu0 %v361
    %593 = vmatpush.msra.mxu0 %v360
    %594 = vmatpush.msra.mxu0 %v359
    %595 = vmatpush.msra.mxu0 %v358
    %596 = vmatpush.msra.mxu0 %v357
    %597 = vmatmul.f32.gmra.mxu0 %v409
    %v598 = vpop.f32.mrf.mxu0
    %v599 = vadd.f32 %v579, %v598
    %600 = vdwg.mxu0
    %601 = vmatpush.msra.mxu0 %v388
    %602 = vmatpush.msra.mxu0 %v387
    %603 = vmatpush.msra.mxu0 %v386
    %604 = vmatpush.msra.mxu0 %v385
    %605 = vmatpush.msra.mxu0 %v384
    %606 = vmatpush.msra.mxu0 %v383
    %607 = vmatpush.msra.mxu0 %v382
    %608 = vmatpush.msra.mxu0 %v381
    %609 = vmatpush.msra.mxu0 %v380
    %610 = vmatpush.msra.mxu0 %v379
    %611 = vmatpush.msra.mxu0 %v378
    %612 = vmatpush.msra.mxu0 %v377
    %613 = vmatpush.msra.mxu0 %v376
    %614 = vmatpush.msra.mxu0 %v375
    %615 = vmatpush.msra.mxu0 %v374
    %616 = vmatpush.msra.mxu0 %v373
    %617 = vmatmul.f32.gmra.mxu0 %v410
    %v618 = vpop.f32.mrf.mxu0
    %v619 = vadd.f32 %v599, %v618
    %620 = vdwg.mxu0
    %vm621 = vcmask 9216
    %622 = vst.msk [vmem:[#allocation3] sm:$0x3] %vm621, %v619
    // Predicated region
    $region26: #{tpu_custom_call.1} parent=1 // pred_check
      _
    $region27: #{tpu_custom_call.1} parent=1 // pred_check_branch
      %624 = sbr.rel (0) target = $region29
    $region28: #{tpu_custom_call.1} parent=1 // pred_region
      %626 = vsyncadd [#allocation4], 0
      %s628 = sshll.u32 [#allocation3], 4
      %s629 = int_to_ptr.vmem [resolvable:$true] %s628
      %s630 = sshll.u32 %s6, 4
      %s631 = int_to_ptr.hbm [resolvable:$true] %s630
      %633 = dma.vmem_to_hbm [thread:$0]  %s629, 32, %s631, [#allocation4]
    $region29: #{tpu_custom_call.1} parent=1 // pred_fallthru
      _
    // Predicated region
    $region30: #{tpu_custom_call.1} parent=1 // pred_check
      _
    $region31: #{tpu_custom_call.1} parent=1 // pred_check_branch
      %635 = sbr.rel (0) target = $region33
    $region32: #{tpu_custom_call.1} parent=1 // pred_region
      %637 = dma.done [#allocation4], 32
    $region33: #{tpu_custom_call.1} parent=1 // pred_fallthru
      _
    %638 = vsyncpa [#allocation4], 1

</llo_original>
